<compile_context>
chip_gen: v5e
topology: v5e:2x2
jax: 0.10.0
libtpu: 0.0.40
codegen_flags: <defaults>
</compile_context>

<pallas_src>
import functools

import jax
import jax.numpy as jnp
from jax import lax
from jax.experimental import pallas as pl
from jax.experimental.pallas import tpu as pltpu


def _round_up(x, m):
    return ((x + m - 1) // m) * m


def _ent_head_kernel(x_ref, wt_ref, b_ref, gamma_ref, beta_ref, o_ref, *,
                     eps, valid_e, pad_e, precision):
    # Dense: x [TM, H] @ wt [H, E_pad] with the contraction on the K-major axis
    # of the RHS. Native-dtype operands, f32 accumulation on the MXU.
    h = lax.dot_general(
        x_ref[...], wt_ref[...],
        dimension_numbers=(((1,), (0,)), ((), ())),
        preferred_element_type=jnp.float32,
        precision=precision,
    )
    h = h + b_ref[...].astype(jnp.float32)

    # GELU (exact, erf-based — matches torch / BERT ACT2FN["gelu"]).
    h = 0.5 * h * (1.0 + lax.erf(h * 0.7071067811865476))

    inv_e = 1.0 / float(valid_e)

    # LayerNorm over the valid hidden_size_ent lanes only. Padded weight rows /
    # bias lanes are exactly zero, so h is 0 there: the mean over E_pad lanes is
    # already the correct sum/E, and the padded lanes of `centered` are exactly
    # -mean, giving a closed-form variance correction (no iota/where mask).
    mean = jnp.sum(h, axis=-1, keepdims=True) * inv_e
    centered = h - mean
    sq = jnp.sum(centered * centered, axis=-1, keepdims=True)
    if pad_e:
        sq = sq - float(pad_e) * (mean * mean)
    var = sq * inv_e
    inv = lax.rsqrt(var + eps)

    out = centered * inv * gamma_ref[...].astype(jnp.float32) \
        + beta_ref[...].astype(jnp.float32)
    o_ref[...] = out.astype(o_ref.dtype)


def ent_prediction_head_transform(hidden_states, weight, bias, gamma, beta, *,
                                  eps=1e-12, matmul_in_bf16=False):
    """hidden_states: [B, S, H]; weight: [E, H] (torch Linear layout);
    bias/gamma/beta: [E]. Returns [B, S, E].

    matmul_in_bf16: if True, cast x and W to bf16 for the MXU (f32 accumulate,
    f32 GELU/LayerNorm). Faster on all generations, no longer bit-matches
    torch f32.
    """
    B, S, H = hidden_states.shape
    E = weight.shape[0]
    M = B * S
    E_pad = _round_up(E, 128)
    pad_e = E_pad - E

    x2d = hidden_states.reshape(M, H)

    if pad_e:
        weight_p = jnp.pad(weight, ((0, pad_e), (0, 0)))
        bias_p = jnp.pad(bias, (0, pad_e))
        gamma_p = jnp.pad(gamma, (0, pad_e))
        beta_p = jnp.pad(beta, (0, pad_e))
    else:
        weight_p, bias_p, gamma_p, beta_p = weight, bias, gamma, beta

    # Optional bf16 matmul path (caller knob).
    if matmul_in_bf16 and x2d.dtype == jnp.float32:
        x_mm = x2d.astype(jnp.bfloat16)
        w_mm = weight_p.astype(jnp.bfloat16)
        precision = None
    else:
        x_mm = x2d
        w_mm = weight_p
        precision = (lax.Precision.HIGHEST
                     if x_mm.dtype == jnp.float32 else None)

    # One-time K-major transpose of the weight: [E_pad, H] -> [H, E_pad].
    wt = jnp.transpose(w_mm, (1, 0))

    b2d = bias_p.reshape(1, E_pad)
    g2d = gamma_p.reshape(1, E_pad)
    be2d = beta_p.reshape(1, E_pad)

    out_dtype = hidden_states.dtype
    x_isz = x_mm.dtype.itemsize
    o_isz = jnp.dtype(out_dtype).itemsize
    w_bytes = wt.size * wt.dtype.itemsize
    param_bytes = 3 * E_pad * b2d.dtype.itemsize

    # Generation-aware VMEM budget (per TensorCore).
    try:
        vmem_cap = int(pltpu.get_tpu_info().vmem_capacity_bytes)
    except Exception:
        vmem_cap = 64 * 1024 * 1024  # conservative (v7x per-core)
    budget = min(int(vmem_cap * 0.6), 48 * 1024 * 1024)

    def footprint(tm):
        xb = 2 * tm * H * x_isz            # double-buffered activation tile
        ob = 2 * tm * E_pad * o_isz        # double-buffered output tile
        interm = 3 * tm * E_pad * 4        # f32 h / centered / pre-cast out
        return xb + ob + interm + w_bytes + param_bytes

    tm = 512
    while tm > 128 and footprint(tm) > budget:
        tm //= 2

    # Align small-M fallback to native sublane packing (8 f32 / 16 bf16 / 32 i8).
    sub = max(8, 32 // min(x_isz, o_isz))
    TM = min(tm, _round_up(M, sub))

    grid = (pl.cdiv(M, TM),)

    vmem_limit = min(int(vmem_cap * 0.9),
                     max(16 * 1024 * 1024, int(footprint(TM) * 1.3)))

    kernel = functools.partial(_ent_head_kernel, eps=float(eps), valid_e=E,
                               pad_e=pad_e, precision=precision)

    cost = pl.CostEstimate(
        flops=2 * M * H * E_pad,
        transcendentals=M * E_pad,
        bytes_accessed=(M * H * x_isz + w_bytes + M * E_pad * o_isz
                        + param_bytes),
    )

    def _build_call(single_buffer_params):
        if single_buffer_params:
            pk = {"pipeline_mode": pl.Buffered(1)}
        else:
            pk = {}
        in_specs = [
            pl.BlockSpec((TM, H), lambda i: (i, 0)),             # x: row-tiled
            pl.BlockSpec((H, E_pad), lambda i: (0, 0), **pk),    # W^T: resident
            pl.BlockSpec((1, E_pad), lambda i: (0, 0), **pk),    # bias
            pl.BlockSpec((1, E_pad), lambda i: (0, 0), **pk),    # gamma
            pl.BlockSpec((1, E_pad), lambda i: (0, 0), **pk),    # beta
        ]
        return pl.pallas_call(
            kernel,
            out_shape=jax.ShapeDtypeStruct((M, E_pad), out_dtype),
            grid=grid,
            in_specs=in_specs,
            out_specs=pl.BlockSpec((TM, E_pad), lambda i: (i, 0)),
            compiler_params=pltpu.CompilerParams(
                dimension_semantics=("parallel",),
                vmem_limit_bytes=vmem_limit),
            cost_estimate=cost,
        )

    try:
        out2d = _build_call(True)(x_mm, wt, b2d, g2d, be2d)
    except Exception:
        # Fallback: default double-buffered invariants.
        out2d = _build_call(False)(x_mm, wt, b2d, g2d, be2d)

    # TODO(synk): callers that can consume the padded [.., E_pad] layout should
    # skip this slice (it is an extra memory-bound pass when not fused).
    out2d = out2d[:, :E]
    return out2d.reshape(B, S, E)


if __name__ == "__main__":
    # Small config consistent with the module: hidden_size=32, hidden_size_ent=64
    batch, seq, hidden, hidden_ent = 2, 8, 32, 64
    layer_norm_eps = 1e-12

    key = jax.random.PRNGKey(0)
    k_x, k_w, k_b, k_g, k_be = jax.random.split(key, 5)

    x = jax.random.normal(k_x, (batch, seq, hidden), dtype=jnp.float32)
    # Deterministic synthetic parameters (torch Linear weight layout: [out, in])
    weight = jax.random.normal(k_w, (hidden_ent, hidden), dtype=jnp.float32) * 0.02
    bias = jax.random.normal(k_b, (hidden_ent,), dtype=jnp.float32) * 0.02
    gamma = 1.0 + 0.01 * jax.random.normal(k_g, (hidden_ent,), dtype=jnp.float32)
    beta = 0.01 * jax.random.normal(k_be, (hidden_ent,), dtype=jnp.float32)

    out = ent_prediction_head_transform(x, weight, bias, gamma, beta,
                                        eps=layer_norm_eps)
    out = jax.block_until_ready(out)

    # Reference check in plain JAX (same math as torch Linear + gelu + LayerNorm).
    h_ref = jnp.einsum("mh,eh->me", x.reshape(-1, hidden), weight,
                       precision=lax.Precision.HIGHEST) + bias
    h_ref = 0.5 * h_ref * (1.0 + lax.erf(h_ref / jnp.sqrt(2.0)))
    mu = jnp.mean(h_ref, axis=-1, keepdims=True)
    var = jnp.mean((h_ref - mu) ** 2, axis=-1, keepdims=True)
    ref = ((h_ref - mu) * lax.rsqrt(var + layer_norm_eps)) * gamma + beta
    ref = ref.reshape(batch, seq, hidden_ent)

    assert out.shape == (batch, seq, hidden_ent)
    max_err = float(jnp.max(jnp.abs(out - ref)))
    assert jnp.allclose(out, ref, atol=1e-4, rtol=1e-4), max_err
    print("KERNEL_OK")
</pallas_src>

<mosaic_0001>
module attributes {stable_mosaic.version = 11 : i64} {
  func.func @_ent_head_kernel(%arg0: i32, %arg1: memref<16x32xf32, #tpu.memory_space<vmem>>, %arg2: memref<32x128xf32, #tpu.memory_space<vmem>>, %arg3: memref<1x128xf32, #tpu.memory_space<vmem>>, %arg4: memref<1x128xf32, #tpu.memory_space<vmem>>, %arg5: memref<1x128xf32, #tpu.memory_space<vmem>>, %arg6: memref<16x128xf32, #tpu.memory_space<vmem>>) attributes {dimension_semantics = [#tpu.dimension_semantics<parallel>], iteration_bounds = array<i64: 1>, scalar_prefetch = 0 : i64, scratch_operands = 0 : i64, tpu.core_type = #tpu.core_type<tc>, window_params = [{transform_indices = @transform_0, window_bounds = array<i64: 16, 32>}, {pipeline_mode = #tpu.pipeline_mode<synchronous>, transform_indices = @transform_1, window_bounds = array<i64: 32, 128>}, {pipeline_mode = #tpu.pipeline_mode<synchronous>, transform_indices = @transform_2, window_bounds = array<i64: 1, 128>}, {pipeline_mode = #tpu.pipeline_mode<synchronous>, transform_indices = @transform_3, window_bounds = array<i64: 1, 128>}, {pipeline_mode = #tpu.pipeline_mode<synchronous>, transform_indices = @transform_4, window_bounds = array<i64: 1, 128>}, {transform_indices = @transform_5, window_bounds = array<i64: 16, 128>}]} {
    %c0 = arith.constant 0 : index
    %c0_0 = arith.constant 0 : index
    %0 = vector.load %arg1[%c0, %c0_0] : memref<16x32xf32, #tpu.memory_space<vmem>>, vector<16x32xf32>
    %c0_1 = arith.constant 0 : index
    %c0_2 = arith.constant 0 : index
    %1 = vector.load %arg2[%c0_1, %c0_2] : memref<32x128xf32, #tpu.memory_space<vmem>>, vector<32x128xf32>
    %cst = arith.constant dense<0.000000e+00> : vector<16x128xf32>
    %2 = tpu.matmul %0, %1, %cst {dimension_numbers = #tpu.dot_dimension_numbers<[1], [0], [0], [1], [0, 0, 1, 1], [], []>, precision = #tpu.contract_precision<fp32>} : vector<16x32xf32>, vector<32x128xf32>, vector<16x128xf32> -> vector<16x128xf32>
    %c0_3 = arith.constant 0 : index
    %c0_4 = arith.constant 0 : index
    %3 = vector.load %arg3[%c0_3, %c0_4] : memref<1x128xf32, #tpu.memory_space<vmem>>, vector<1x128xf32>
    %4 = vector.broadcast %3 : vector<1x128xf32> to vector<16x128xf32>
    %5 = arith.addf %2, %4 : vector<16x128xf32>
    %cst_5 = arith.constant 5.000000e-01 : f32
    %6 = vector.broadcast %cst_5 : f32 to vector<16x128xf32>
    %7 = arith.mulf %6, %5 : vector<16x128xf32>
    %cst_6 = arith.constant 0.707106769 : f32
    %8 = vector.broadcast %cst_6 : f32 to vector<16x128xf32>
    %9 = arith.mulf %5, %8 : vector<16x128xf32>
    %10 = math.erf %9 : vector<16x128xf32>
    %cst_7 = arith.constant 1.000000e+00 : f32
    %11 = vector.broadcast %cst_7 : f32 to vector<16x128xf32>
    %12 = arith.addf %11, %10 : vector<16x128xf32>
    %13 = arith.mulf %7, %12 : vector<16x128xf32>
    %cst_8 = arith.constant dense<0.000000e+00> : vector<16xf32>
    %14 = vector.multi_reduction <add>, %13, %cst_8 [1] : vector<16x128xf32> to vector<16xf32>
    %15 = vector.shape_cast %14 : vector<16xf32> to vector<16x1xf32>
    %cst_9 = arith.constant 1.562500e-02 : f32
    %16 = vector.broadcast %cst_9 : f32 to vector<16x1xf32>
    %17 = arith.mulf %15, %16 : vector<16x1xf32>
    %18 = vector.broadcast %17 : vector<16x1xf32> to vector<16x128xf32>
    %19 = arith.subf %13, %18 : vector<16x128xf32>
    %20 = arith.mulf %19, %19 : vector<16x128xf32>
    %cst_10 = arith.constant dense<0.000000e+00> : vector<16xf32>
    %21 = vector.multi_reduction <add>, %20, %cst_10 [1] : vector<16x128xf32> to vector<16xf32>
    %22 = vector.shape_cast %21 : vector<16xf32> to vector<16x1xf32>
    %23 = arith.mulf %17, %17 : vector<16x1xf32>
    %cst_11 = arith.constant 6.400000e+01 : f32
    %24 = vector.broadcast %cst_11 : f32 to vector<16x1xf32>
    %25 = arith.mulf %24, %23 : vector<16x1xf32>
    %26 = arith.subf %22, %25 : vector<16x1xf32>
    %cst_12 = arith.constant 1.562500e-02 : f32
    %27 = vector.broadcast %cst_12 : f32 to vector<16x1xf32>
    %28 = arith.mulf %26, %27 : vector<16x1xf32>
    %cst_13 = arith.constant 9.99999996E-13 : f32
    %29 = vector.broadcast %cst_13 : f32 to vector<16x1xf32>
    %30 = arith.addf %28, %29 : vector<16x1xf32>
    %31 = math.rsqrt %30 : vector<16x1xf32>
    %32 = vector.broadcast %31 : vector<16x1xf32> to vector<16x128xf32>
    %33 = arith.mulf %19, %32 : vector<16x128xf32>
    %c0_14 = arith.constant 0 : index
    %c0_15 = arith.constant 0 : index
    %34 = vector.load %arg4[%c0_14, %c0_15] : memref<1x128xf32, #tpu.memory_space<vmem>>, vector<1x128xf32>
    %35 = vector.broadcast %34 : vector<1x128xf32> to vector<16x128xf32>
    %36 = arith.mulf %33, %35 : vector<16x128xf32>
    %c0_16 = arith.constant 0 : index
    %c0_17 = arith.constant 0 : index
    %37 = vector.load %arg5[%c0_16, %c0_17] : memref<1x128xf32, #tpu.memory_space<vmem>>, vector<1x128xf32>
    %38 = vector.broadcast %37 : vector<1x128xf32> to vector<16x128xf32>
    %39 = arith.addf %36, %38 : vector<16x128xf32>
    %c0_18 = arith.constant 0 : index
    %c0_19 = arith.constant 0 : index
    %40 = vector.load %arg6[%c0_18, %c0_19] : memref<16x128xf32, #tpu.memory_space<vmem>>, vector<16x128xf32>
    tpu.vector_store %arg6[%c0_18, %c0_19], %39 {strides = array<i32>} : memref<16x128xf32, #tpu.memory_space<vmem>>, vector<16x128xf32>,
    return
  }
  func.func @transform_0(%arg0: i32) -> (i32, i32) {
    %c0_i32 = arith.constant 0 : i32
    %c0_i32_0 = arith.constant 0 : i32
    return %arg0, %c0_i32 : i32, i32
  }
  func.func @transform_1(%arg0: i32) -> (i32, i32) {
    %c0_i32 = arith.constant 0 : i32
    %c0_i32_0 = arith.constant 0 : i32
    %c0_i32_1 = arith.constant 0 : i32
    return %c0_i32, %c0_i32_0 : i32, i32
  }
  func.func @transform_2(%arg0: i32) -> (i32, i32) {
    %c0_i32 = arith.constant 0 : i32
    %c0_i32_0 = arith.constant 0 : i32
    %c0_i32_1 = arith.constant 0 : i32
    return %c0_i32, %c0_i32_0 : i32, i32
  }
  func.func @transform_3(%arg0: i32) -> (i32, i32) {
    %c0_i32 = arith.constant 0 : i32
    %c0_i32_0 = arith.constant 0 : i32
    %c0_i32_1 = arith.constant 0 : i32
    return %c0_i32, %c0_i32_0 : i32, i32
  }
  func.func @transform_4(%arg0: i32) -> (i32, i32) {
    %c0_i32 = arith.constant 0 : i32
    %c0_i32_0 = arith.constant 0 : i32
    %c0_i32_1 = arith.constant 0 : i32
    return %c0_i32, %c0_i32_0 : i32, i32
  }
  func.func @transform_5(%arg0: i32) -> (i32, i32) {
    %c0_i32 = arith.constant 0 : i32
    %c0_i32_0 = arith.constant 0 : i32
    return %arg0, %c0_i32 : i32, i32
  }
}

module attributes {stable_mosaic.version = 11 : i64} {
  func.func @_ent_head_kernel(%arg0: i32, %arg1: memref<16x32xf32, #tpu.memory_space<vmem>>, %arg2: memref<32x128xf32, #tpu.memory_space<vmem>>, %arg3: memref<1x128xf32, #tpu.memory_space<vmem>>, %arg4: memref<1x128xf32, #tpu.memory_space<vmem>>, %arg5: memref<1x128xf32, #tpu.memory_space<vmem>>, %arg6: memref<16x128xf32, #tpu.memory_space<vmem>>) attributes {dimension_semantics = [#tpu.dimension_semantics<parallel>], iteration_bounds = array<i64: 1>, scalar_prefetch = 0 : i64, scratch_operands = 0 : i64, tpu.core_type = #tpu.core_type<tc>, window_params = [{transform_indices = @transform_0, window_bounds = array<i64: 16, 32>}, {pipeline_mode = #tpu.pipeline_mode<synchronous>, transform_indices = @transform_1, window_bounds = array<i64: 32, 128>}, {pipeline_mode = #tpu.pipeline_mode<synchronous>, transform_indices = @transform_2, window_bounds = array<i64: 1, 128>}, {pipeline_mode = #tpu.pipeline_mode<synchronous>, transform_indices = @transform_3, window_bounds = array<i64: 1, 128>}, {pipeline_mode = #tpu.pipeline_mode<synchronous>, transform_indices = @transform_4, window_bounds = array<i64: 1, 128>}, {transform_indices = @transform_5, window_bounds = array<i64: 16, 128>}]} {
    %c0 = arith.constant 0 : index
    %c0_0 = arith.constant 0 : index
    %0 = vector.load %arg1[%c0, %c0_0] : memref<16x32xf32, #tpu.memory_space<vmem>>, vector<16x32xf32>
    %c0_1 = arith.constant 0 : index
    %c0_2 = arith.constant 0 : index
    %1 = vector.load %arg2[%c0_1, %c0_2] : memref<32x128xf32, #tpu.memory_space<vmem>>, vector<32x128xf32>
    %cst = arith.constant dense<0.000000e+00> : vector<16x128xf32>
    %2 = tpu.matmul %0, %1, %cst {dimension_numbers = #tpu.dot_dimension_numbers<[1], [0], [0], [1], [0, 0, 1, 1], [], []>, precision = #tpu.contract_precision<fp32>} : vector<16x32xf32>, vector<32x128xf32>, vector<16x128xf32> -> vector<16x128xf32>
    %c0_3 = arith.constant 0 : index
    %c0_4 = arith.constant 0 : index
    %3 = vector.load %arg3[%c0_3, %c0_4] : memref<1x128xf32, #tpu.memory_space<vmem>>, vector<1x128xf32>
    %4 = vector.broadcast %3 : vector<1x128xf32> to vector<16x128xf32>
    %5 = arith.addf %2, %4 : vector<16x128xf32>
    %cst_5 = arith.constant 5.000000e-01 : f32
    %6 = vector.broadcast %cst_5 : f32 to vector<16x128xf32>
    %7 = arith.mulf %6, %5 : vector<16x128xf32>
    %cst_6 = arith.constant 0.707106769 : f32
    %8 = vector.broadcast %cst_6 : f32 to vector<16x128xf32>
    %9 = arith.mulf %5, %8 : vector<16x128xf32>
    %10 = math.erf %9 : vector<16x128xf32>
    %cst_7 = arith.constant 1.000000e+00 : f32
    %11 = vector.broadcast %cst_7 : f32 to vector<16x128xf32>
    %12 = arith.addf %11, %10 : vector<16x128xf32>
    %13 = arith.mulf %7, %12 : vector<16x128xf32>
    %cst_8 = arith.constant dense<0.000000e+00> : vector<16xf32>
    %14 = vector.multi_reduction <add>, %13, %cst_8 [1] : vector<16x128xf32> to vector<16xf32>
    %15 = vector.shape_cast %14 : vector<16xf32> to vector<16x1xf32>
    %cst_9 = arith.constant 1.562500e-02 : f32
    %16 = vector.broadcast %cst_9 : f32 to vector<16x1xf32>
    %17 = arith.mulf %15, %16 : vector<16x1xf32>
    %18 = vector.broadcast %17 : vector<16x1xf32> to vector<16x128xf32>
    %19 = arith.subf %13, %18 : vector<16x128xf32>
    %20 = arith.mulf %19, %19 : vector<16x128xf32>
    %cst_10 = arith.constant dense<0.000000e+00> : vector<16xf32>
    %21 = vector.multi_reduction <add>, %20, %cst_10 [1] : vector<16x128xf32> to vector<16xf32>
    %22 = vector.shape_cast %21 : vector<16xf32> to vector<16x1xf32>
    %23 = arith.mulf %17, %17 : vector<16x1xf32>
    %cst_11 = arith.constant 6.400000e+01 : f32
    %24 = vector.broadcast %cst_11 : f32 to vector<16x1xf32>
    %25 = arith.mulf %24, %23 : vector<16x1xf32>
    %26 = arith.subf %22, %25 : vector<16x1xf32>
    %cst_12 = arith.constant 1.562500e-02 : f32
    %27 = vector.broadcast %cst_12 : f32 to vector<16x1xf32>
    %28 = arith.mulf %26, %27 : vector<16x1xf32>
    %cst_13 = arith.constant 9.99999996E-13 : f32
    %29 = vector.broadcast %cst_13 : f32 to vector<16x1xf32>
    %30 = arith.addf %28, %29 : vector<16x1xf32>
    %31 = math.rsqrt %30 : vector<16x1xf32>
    %32 = vector.broadcast %31 : vector<16x1xf32> to vector<16x128xf32>
    %33 = arith.mulf %19, %32 : vector<16x128xf32>
    %c0_14 = arith.constant 0 : index
    %c0_15 = arith.constant 0 : index
    %34 = vector.load %arg4[%c0_14, %c0_15] : memref<1x128xf32, #tpu.memory_space<vmem>>, vector<1x128xf32>
    %35 = vector.broadcast %34 : vector<1x128xf32> to vector<16x128xf32>
    %36 = arith.mulf %33, %35 : vector<16x128xf32>
    %c0_16 = arith.constant 0 : index
    %c0_17 = arith.constant 0 : index
    %37 = vector.load %arg5[%c0_16, %c0_17] : memref<1x128xf32, #tpu.memory_space<vmem>>, vector<1x128xf32>
    %38 = vector.broadcast %37 : vector<1x128xf32> to vector<16x128xf32>
    %39 = arith.addf %36, %38 : vector<16x128xf32>
    %c0_18 = arith.constant 0 : index
    %c0_19 = arith.constant 0 : index
    %40 = vector.load %arg6[%c0_18, %c0_19] : memref<16x128xf32, #tpu.memory_space<vmem>>, vector<16x128xf32>
    tpu.vector_store %arg6[%c0_18, %c0_19], %39 {strides = array<i32>} : memref<16x128xf32, #tpu.memory_space<vmem>>, vector<16x128xf32>,
    return
  }
  func.func @transform_0(%arg0: i32) -> (i32, i32) {
    %c0_i32 = arith.constant 0 : i32
    %c0_i32_0 = arith.constant 0 : i32
    return %arg0, %c0_i32 : i32, i32
  }
  func.func @transform_1(%arg0: i32) -> (i32, i32) {
    %c0_i32 = arith.constant 0 : i32
    %c0_i32_0 = arith.constant 0 : i32
    %c0_i32_1 = arith.constant 0 : i32
    return %c0_i32, %c0_i32_0 : i32, i32
  }
  func.func @transform_2(%arg0: i32) -> (i32, i32) {
    %c0_i32 = arith.constant 0 : i32
    %c0_i32_0 = arith.constant 0 : i32
    %c0_i32_1 = arith.constant 0 : i32
    return %c0_i32, %c0_i32_0 : i32, i32
  }
  func.func @transform_3(%arg0: i32) -> (i32, i32) {
    %c0_i32 = arith.constant 0 : i32
    %c0_i32_0 = arith.constant 0 : i32
    %c0_i32_1 = arith.constant 0 : i32
    return %c0_i32, %c0_i32_0 : i32, i32
  }
  func.func @transform_4(%arg0: i32) -> (i32, i32) {
    %c0_i32 = arith.constant 0 : i32
    %c0_i32_0 = arith.constant 0 : i32
    %c0_i32_1 = arith.constant 0 : i32
    return %c0_i32, %c0_i32_0 : i32, i32
  }
  func.func @transform_5(%arg0: i32) -> (i32, i32) {
    %c0_i32 = arith.constant 0 : i32
    %c0_i32_0 = arith.constant 0 : i32
    return %arg0, %c0_i32 : i32, i32
  }
}

</mosaic_0001>

<llo_original>
// kernel: tpu_custom_call.1
$region0: #{tpu_custom_call.1}
  #allocation0 [shape = 'u32[]', space=smem, size = 0x4, offset = 0x4, fixed_abs, tag = 'smem constant byte address 0x4 - core index']
  #allocation1 [shape = 'u32[72,128]{1,0:T(1,128)}', space=vmem, size = 0x9000, scoped, tag = 'internal scratch']
  %s0 = inlined_call_operand.hbm [shape: f32[16,32], index: 0, kind: input, shape index: {}]
  %s1 = inlined_call_operand.hbm [shape: f32[32,128], index: 1, kind: input, shape index: {}]
  %s2 = inlined_call_operand.vmem [shape: f32[1,128], index: 2, kind: input, shape index: {}]
  %s3 = inlined_call_operand.vmem [shape: f32[1,128], index: 3, kind: input, shape index: {}]
  %s4 = inlined_call_operand.vmem [shape: f32[1,128], index: 4, kind: input, shape index: {}]
  %s5 = inlined_call_operand.hbm [shape: f32[16,128], index: 5, kind: output, shape index: {}]
  %s6 = sld [smem:[#allocation0]]
  $region38: #{tpu_custom_call.1} parent=0
    _
  %s8 = ssub.s32 1, %s6
  %s9 = scalar_select 0, %s8, %s6
  $region1: #{tpu_custom_call.1} parent=0
    #allocation2 [shape = 'u8[8192]{0}', space=vmem, size = 0x2000, scoped, tag = 'input window, operand 0, single buffered']
    #allocation3 [shape = 's32[1]{0}', space=sflag, size = 0x4, scoped, tag = 'scoped memory for tpu_custom_call.1']
    #allocation4 [shape = 's32[1]{0}', space=sflag, size = 0x4, scoped, tag = 'scoped memory for tpu_custom_call.1']
    #allocation5 [shape = 'u8[16384]{0}', space=vmem, size = 0x4000, scoped, tag = 'input window, operand 1, single buffered']
    #allocation6 [shape = 's32[1]{0}', space=sflag, size = 0x4, scoped, tag = 'scoped memory for tpu_custom_call.1']
    #allocation7 [shape = 'u8[8192]{0}', space=vmem, size = 0x2000, scoped, tag = 'output window, operand 0, single buffered']
    %10 = vsyncpa [#allocation3], 0
    %11 = vsyncpa [#allocation6], 0
    %12 = vsyncpa [#allocation4], 0
    // Predicated region
    $region2: #{tpu_custom_call.1} parent=1 // pred_check
      _
    $region3: #{tpu_custom_call.1} parent=1 // pred_check_branch
      %14 = sbr.rel (0) target = $region5
    $region4: #{tpu_custom_call.1} parent=1 // pred_region
      %16 = vsyncadd [#allocation3], 0
      %s17 = sshll.u32 %s0, 4
      %s18 = int_to_ptr.hbm [resolvable:$true] %s17
      %s19 = sshll.u32 [#allocation2], 4
      %s20 = int_to_ptr.vmem [resolvable:$true] %s19
      %25 = dma.hbm_to_vmem [thread:$0]  %s18, 256, %s20, [#allocation3], 128, 128, 8
    $region5: #{tpu_custom_call.1} parent=1 // pred_fallthru
      _
    // Predicated region
    $region6: #{tpu_custom_call.1} parent=1 // pred_check
      _
    $region7: #{tpu_custom_call.1} parent=1 // pred_check_branch
      %27 = sbr.rel (0) target = $region9
    $region8: #{tpu_custom_call.1} parent=1 // pred_region
      %29 = vsyncadd [#allocation6], 0
      %s30 = sshll.u32 %s1, 4
      %s31 = int_to_ptr.hbm [resolvable:$true] %s30
      %s32 = sshll.u32 [#allocation5], 4
      %s33 = int_to_ptr.vmem [resolvable:$true] %s32
      %38 = dma.hbm_to_vmem [thread:$0]  %s31, 512, %s33, [#allocation6], 128, 128, 8
    $region9: #{tpu_custom_call.1} parent=1 // pred_fallthru
      _
    // Predicated region
    $region10: #{tpu_custom_call.1} parent=1 // pred_check
      _
    $region11: #{tpu_custom_call.1} parent=1 // pred_check_branch
      %40 = sbr.rel (0) target = $region13
    $region12: #{tpu_custom_call.1} parent=1 // pred_region
      _
    $region13: #{tpu_custom_call.1} parent=1 // pred_fallthru
      _
    // Predicated region
    $region14: #{tpu_custom_call.1} parent=1 // pred_check
      _
    $region15: #{tpu_custom_call.1} parent=1 // pred_check_branch
      %42 = sbr.rel (0) target = $region17
    $region16: #{tpu_custom_call.1} parent=1 // pred_region
      _
    $region17: #{tpu_custom_call.1} parent=1 // pred_fallthru
      _
    // Predicated region
    $region18: #{tpu_custom_call.1} parent=1 // pred_check
      _
    $region19: #{tpu_custom_call.1} parent=1 // pred_check_branch
      %44 = sbr.rel (0) target = $region21
    $region20: #{tpu_custom_call.1} parent=1 // pred_region
      _
    $region21: #{tpu_custom_call.1} parent=1 // pred_fallthru
      _
    // Predicated region
    $region22: #{tpu_custom_call.1} parent=1 // pred_check
      _
    $region23: #{tpu_custom_call.1} parent=1 // pred_check_branch
      %46 = sbr.rel (0) target = $region25
    $region24: #{tpu_custom_call.1} parent=1 // pred_region
      %48 = dma.done [#allocation3], 256
    $region25: #{tpu_custom_call.1} parent=1 // pred_fallthru
      _
    // Predicated region
    $region26: #{tpu_custom_call.1} parent=1 // pred_check
      _
    $region27: #{tpu_custom_call.1} parent=1 // pred_check_branch
      %50 = sbr.rel (0) target = $region29
    $region28: #{tpu_custom_call.1} parent=1 // pred_region
      %52 = dma.done [#allocation6], 512
    $region29: #{tpu_custom_call.1} parent=1 // pred_fallthru
      _
    %v53 = vld [vmem:[#allocation2] sm:$0xff]
    %v54 = vld [vmem:[#allocation2 + $0x8] sm:$0xff]
    %v55 = vld [vmem:[#allocation5] sm:$0xff]
    %v56 = vld [vmem:[#allocation5 + $0x8] sm:$0xff]
    %v57 = vld [vmem:[#allocation5 + $0x10] sm:$0xff]
    %v58 = vld [vmem:[#allocation5 + $0x18] sm:$0xff]
    %v59 = vld [vmem:[%s2] sm:$0x1]
    %v61 = vperm.slane %v59, 0
    %vm63 = vcmask 261120
    %v65 = vsel %vm63, %v53, 0
    %v68 = vsel %vm63, %v54, 0
    %70 = vmatpush.msra.mxu0 0.0
    %71 = vmatpush.msra.mxu0 0.0
    %72 = vmatpush.msra.mxu0 0.0
    %73 = vmatpush.msra.mxu0 0.0
    %74 = vmatpush.msra.mxu0 0.0
    %75 = vmatpush.msra.mxu0 0.0
    %76 = vmatpush.msra.mxu0 0.0
    %77 = vmatpush.msra.mxu0 0.0
    %78 = vmatpush.msra.mxu0 0.0
    %79 = vmatpush.msra.mxu0 0.0
    %80 = vmatpush.msra.mxu0 0.0
    %81 = vmatpush.msra.mxu0 0.0
    %v82 = vand.u32 %v58, 4294901760
    %83 = vmatpush.msra.mxu0 %v82
    %v84 = vand.u32 %v57, 4294901760
    %85 = vmatpush.msra.mxu0 %v84
    %v86 = vand.u32 %v56, 4294901760
    %87 = vmatpush.msra.mxu0 %v86
    %v88 = vand.u32 %v55, 4294901760
    %89 = vmatpush.msra.mxu0 %v88
    %v90 = vand.u32 %v65, 4294901760
    %v91 = vsub.f32 %v65, %v90
    %v92 = vand.u32 %v91, 4294901760
    %v93 = vsub.f32 %v91, %v92
    %v94 = vand.u32 %v93, 4294901760
    %95 = vmatmul.f32.gmra.mxu0 %v94
    %v96 = vpop.f32.mrf.mxu0
    %v97 = vadd.f32 %v61, %v96
    %v98 = vand.u32 %v68, 4294901760
    %v99 = vsub.f32 %v68, %v98
    %v100 = vand.u32 %v99, 4294901760
    %v101 = vsub.f32 %v99, %v100
    %v102 = vand.u32 %v101, 4294901760
    %103 = vmatmul.f32.gmra.mxu0 %v102
    %v104 = vpop.f32.mrf.mxu0
    %v105 = vadd.f32 %v61, %v104
    %106 = vdwg.mxu0
    %107 = vmatpush.msra.mxu0 0.0
    %108 = vmatpush.msra.mxu0 0.0
    %109 = vmatpush.msra.mxu0 0.0
    %110 = vmatpush.msra.mxu0 0.0
    %111 = vmatpush.msra.mxu0 0.0
    %112 = vmatpush.msra.mxu0 0.0
    %113 = vmatpush.msra.mxu0 0.0
    %114 = vmatpush.msra.mxu0 0.0
    %115 = vmatpush.msra.mxu0 0.0
    %116 = vmatpush.msra.mxu0 0.0
    %117 = vmatpush.msra.mxu0 0.0
    %118 = vmatpush.msra.mxu0 0.0
    %v119 = vand.u32 %v58, 4294901760
    %v120 = vsub.f32 %v58, %v119
    %v121 = vand.u32 %v120, 4294901760
    %v122 = vsub.f32 %v120, %v121
    %v123 = vand.u32 %v122, 4294901760
    %124 = vmatpush.msra.mxu0 %v123
    %v125 = vand.u32 %v57, 4294901760
    %v126 = vsub.f32 %v57, %v125
    %v127 = vand.u32 %v126, 4294901760
    %v128 = vsub.f32 %v126, %v127
    %v129 = vand.u32 %v128, 4294901760
    %130 = vmatpush.msra.mxu0 %v129
    %v131 = vand.u32 %v56, 4294901760
    %v132 = vsub.f32 %v56, %v131
    %v133 = vand.u32 %v132, 4294901760
    %v134 = vsub.f32 %v132, %v133
    %v135 = vand.u32 %v134, 4294901760
    %136 = vmatpush.msra.mxu0 %v135
    %v137 = vand.u32 %v55, 4294901760
    %v138 = vsub.f32 %v55, %v137
    %v139 = vand.u32 %v138, 4294901760
    %v140 = vsub.f32 %v138, %v139
    %v141 = vand.u32 %v140, 4294901760
    %142 = vmatpush.msra.mxu0 %v141
    %v143 = vand.u32 %v65, 4294901760
    %144 = vmatmul.f32.gmra.mxu0 %v143
    %v145 = vpop.f32.mrf.mxu0
    %v146 = vadd.f32 %v97, %v145
    %v147 = vand.u32 %v68, 4294901760
    %148 = vmatmul.f32.gmra.mxu0 %v147
    %v149 = vpop.f32.mrf.mxu0
    %v150 = vadd.f32 %v105, %v149
    %151 = vdwg.mxu0
    %152 = vmatpush.msra.mxu0 0.0
    %153 = vmatpush.msra.mxu0 0.0
    %154 = vmatpush.msra.mxu0 0.0
    %155 = vmatpush.msra.mxu0 0.0
    %156 = vmatpush.msra.mxu0 0.0
    %157 = vmatpush.msra.mxu0 0.0
    %158 = vmatpush.msra.mxu0 0.0
    %159 = vmatpush.msra.mxu0 0.0
    %160 = vmatpush.msra.mxu0 0.0
    %161 = vmatpush.msra.mxu0 0.0
    %162 = vmatpush.msra.mxu0 0.0
    %163 = vmatpush.msra.mxu0 0.0
    %v164 = vand.u32 %v58, 4294901760
    %v165 = vsub.f32 %v58, %v164
    %166 = vmatpush.msra.mxu0 %v165
    %v167 = vand.u32 %v57, 4294901760
    %v168 = vsub.f32 %v57, %v167
    %169 = vmatpush.msra.mxu0 %v168
    %v170 = vand.u32 %v56, 4294901760
    %v171 = vsub.f32 %v56, %v170
    %172 = vmatpush.msra.mxu0 %v171
    %v173 = vand.u32 %v55, 4294901760
    %v174 = vsub.f32 %v55, %v173
    %175 = vmatpush.msra.mxu0 %v174
    %v176 = vand.u32 %v65, 4294901760
    %v177 = vsub.f32 %v65, %v176
    %178 = vmatmul.f32.gmra.mxu0 %v177
    %v179 = vpop.f32.mrf.mxu0
    %v180 = vadd.f32 %v146, %v179
    %v181 = vand.u32 %v68, 4294901760
    %v182 = vsub.f32 %v68, %v181
    %183 = vmatmul.f32.gmra.mxu0 %v182
    %v184 = vpop.f32.mrf.mxu0
    %v185 = vadd.f32 %v150, %v184
    %186 = vdwg.mxu0
    %187 = vmatpush.msra.mxu0 0.0
    %188 = vmatpush.msra.mxu0 0.0
    %189 = vmatpush.msra.mxu0 0.0
    %190 = vmatpush.msra.mxu0 0.0
    %191 = vmatpush.msra.mxu0 0.0
    %192 = vmatpush.msra.mxu0 0.0
    %193 = vmatpush.msra.mxu0 0.0
    %194 = vmatpush.msra.mxu0 0.0
    %195 = vmatpush.msra.mxu0 0.0
    %196 = vmatpush.msra.mxu0 0.0
    %197 = vmatpush.msra.mxu0 0.0
    %198 = vmatpush.msra.mxu0 0.0
    %v199 = vand.u32 %v58, 4294901760
    %200 = vmatpush.msra.mxu0 %v199
    %v201 = vand.u32 %v57, 4294901760
    %202 = vmatpush.msra.mxu0 %v201
    %v203 = vand.u32 %v56, 4294901760
    %204 = vmatpush.msra.mxu0 %v203
    %v205 = vand.u32 %v55, 4294901760
    %206 = vmatpush.msra.mxu0 %v205
    %v207 = vand.u32 %v65, 4294901760
    %v208 = vsub.f32 %v65, %v207
    %v209 = vand.u32 %v208, 4294901760
    %210 = vmatmul.f32.gmra.mxu0 %v209
    %v211 = vpop.f32.mrf.mxu0
    %v212 = vadd.f32 %v180, %v211
    %v213 = vand.u32 %v68, 4294901760
    %v214 = vsub.f32 %v68, %v213
    %v215 = vand.u32 %v214, 4294901760
    %216 = vmatmul.f32.gmra.mxu0 %v215
    %v217 = vpop.f32.mrf.mxu0
    %v218 = vadd.f32 %v185, %v217
    %219 = vdwg.mxu0
    %220 = vmatpush.msra.mxu0 0.0
    %221 = vmatpush.msra.mxu0 0.0
    %222 = vmatpush.msra.mxu0 0.0
    %223 = vmatpush.msra.mxu0 0.0
    %224 = vmatpush.msra.mxu0 0.0
    %225 = vmatpush.msra.mxu0 0.0
    %226 = vmatpush.msra.mxu0 0.0
    %227 = vmatpush.msra.mxu0 0.0
    %228 = vmatpush.msra.mxu0 0.0
    %229 = vmatpush.msra.mxu0 0.0
    %230 = vmatpush.msra.mxu0 0.0
    %231 = vmatpush.msra.mxu0 0.0
    %v232 = vand.u32 %v58, 4294901760
    %v233 = vsub.f32 %v58, %v232
    %v234 = vand.u32 %v233, 4294901760
    %235 = vmatpush.msra.mxu0 %v234
    %v236 = vand.u32 %v57, 4294901760
    %v237 = vsub.f32 %v57, %v236
    %v238 = vand.u32 %v237, 4294901760
    %239 = vmatpush.msra.mxu0 %v238
    %v240 = vand.u32 %v56, 4294901760
    %v241 = vsub.f32 %v56, %v240
    %v242 = vand.u32 %v241, 4294901760
    %243 = vmatpush.msra.mxu0 %v242
    %v244 = vand.u32 %v55, 4294901760
    %v245 = vsub.f32 %v55, %v244
    %v246 = vand.u32 %v245, 4294901760
    %247 = vmatpush.msra.mxu0 %v246
    %v248 = vand.u32 %v65, 4294901760
    %249 = vmatmul.f32.gmra.mxu0 %v248
    %v250 = vpop.f32.mrf.mxu0
    %v251 = vadd.f32 %v212, %v250
    %v252 = vand.u32 %v68, 4294901760
    %253 = vmatmul.f32.gmra.mxu0 %v252
    %v254 = vpop.f32.mrf.mxu0
    %v255 = vadd.f32 %v218, %v254
    %256 = vdwg.mxu0
    %257 = vmatpush.msra.mxu0 0.0
    %258 = vmatpush.msra.mxu0 0.0
    %259 = vmatpush.msra.mxu0 0.0
    %260 = vmatpush.msra.mxu0 0.0
    %261 = vmatpush.msra.mxu0 0.0
    %262 = vmatpush.msra.mxu0 0.0
    %263 = vmatpush.msra.mxu0 0.0
    %264 = vmatpush.msra.mxu0 0.0
    %265 = vmatpush.msra.mxu0 0.0
    %266 = vmatpush.msra.mxu0 0.0
    %267 = vmatpush.msra.mxu0 0.0
    %268 = vmatpush.msra.mxu0 0.0
    %v269 = vand.u32 %v58, 4294901760
    %270 = vmatpush.msra.mxu0 %v269
    %v271 = vand.u32 %v57, 4294901760
    %272 = vmatpush.msra.mxu0 %v271
    %v273 = vand.u32 %v56, 4294901760
    %274 = vmatpush.msra.mxu0 %v273
    %v275 = vand.u32 %v55, 4294901760
    %276 = vmatpush.msra.mxu0 %v275
    %v277 = vand.u32 %v65, 4294901760
    %278 = vmatmul.f32.gmra.mxu0 %v277
    %v279 = vpop.f32.mrf.mxu0
    %v280 = vadd.f32 %v251, %v279
    %v281 = vand.u32 %v68, 4294901760
    %282 = vmatmul.f32.gmra.mxu0 %v281
    %v283 = vpop.f32.mrf.mxu0
    %v284 = vadd.f32 %v255, %v283
    %285 = vdwg.mxu0
    %v286 = vmul.f32 %v280, 0.5
    %v287 = vmul.f32 %v284, 0.5
    %v288 = vmul.f32 %v280, 0.70710677
    %v289 = vmul.f32 %v284, 0.70710677
    %v290 = vmul.f32 %v288, %v288
    %v291 = vmin.f32 16.0, %v290
    %v292 = vmul.f32 %v291, 2.1237322e-06
    %v293 = vadd.f32 %v292, 0.00028619796
    %v294 = vmul.f32 %v291, %v293
    %v295 = vadd.f32 %v294, 0.0036580483
    %v296 = vmul.f32 %v291, %v295
    %v297 = vadd.f32 %v296, 0.05243302
    %v298 = vmul.f32 %v291, %v297
    %v299 = vadd.f32 %v298, 0.18741608
    %v300 = vmul.f32 %v291, %v299
    %v301 = vadd.f32 %v300, 1.1283791
    %v302 = vmul.f32 %v288, %v301
    %v303 = vmul.f32 %v291, 3.8918573e-05
    %v304 = vadd.f32 %v303, 0.001143296
    %v305 = vmul.f32 %v291, %v304
    %v306 = vadd.f32 %v305, 0.014752088
    %v307 = vmul.f32 %v291, %v306
    %v308 = vadd.f32 %v307, 0.112945676
    %v309 = vmul.f32 %v291, %v308
    %v310 = vadd.f32 %v309, 0.4994258
    %v311 = vmul.f32 %v291, %v310
    %v312 = vadd.f32 %v311, 1.0
    %v313 = vrcp.pop %v312
    %v314 = vmul.f32 %v312, %v313
    %v315 = vsub.f32 1.0, %v314
    %v316 = vmul.f32 %v313, %v315
    %v317 = vadd.f32 %v313, %v316
    %vm318 = vweird.f32 %v312
    %vm319 = vweird.f32 %v313
    %vm320 = vmor %vm318, %vm319
    %v321 = vsel %vm320, %v313, %v317
    %v322 = vand.u32 2147483647, %v312
    %vm323 = vcmp.eq.f32.partialorder %v322, 8.507059e+37
    %v324 = vand.u32 %v312, 2147483648
    %v325 = vor.u32 1.1754944e-38, %v324
    %v326 = vsel %vm323, %v325, %v321
    %v327 = vmul.f32 %v302, %v326
    %v328 = vmin.f32 %v327, 1.0
    %v329 = vmax.f32 %v328, -1.0
    %v330 = vmul.f32 %v289, %v289
    %v331 = vmin.f32 16.0, %v330
    %v332 = vmul.f32 %v331, 2.1237322e-06
    %v333 = vadd.f32 %v332, 0.00028619796
    %v334 = vmul.f32 %v331, %v333
    %v335 = vadd.f32 %v334, 0.0036580483
    %v336 = vmul.f32 %v331, %v335
    %v337 = vadd.f32 %v336, 0.05243302
    %v338 = vmul.f32 %v331, %v337
    %v339 = vadd.f32 %v338, 0.18741608
    %v340 = vmul.f32 %v331, %v339
    %v341 = vadd.f32 %v340, 1.1283791
    %v342 = vmul.f32 %v289, %v341
    %v343 = vmul.f32 %v331, 3.8918573e-05
    %v344 = vadd.f32 %v343, 0.001143296
    %v345 = vmul.f32 %v331, %v344
    %v346 = vadd.f32 %v345, 0.014752088
    %v347 = vmul.f32 %v331, %v346
    %v348 = vadd.f32 %v347, 0.112945676
    %v349 = vmul.f32 %v331, %v348
    %v350 = vadd.f32 %v349, 0.4994258
    %v351 = vmul.f32 %v331, %v350
    %v352 = vadd.f32 %v351, 1.0
    %v353 = vrcp.pop %v352
    %v354 = vmul.f32 %v352, %v353
    %v355 = vsub.f32 1.0, %v354
    %v356 = vmul.f32 %v353, %v355
    %v357 = vadd.f32 %v353, %v356
    %vm358 = vweird.f32 %v352
    %vm359 = vweird.f32 %v353
    %vm360 = vmor %vm358, %vm359
    %v361 = vsel %vm360, %v353, %v357
    %v362 = vand.u32 2147483647, %v352
    %vm363 = vcmp.eq.f32.partialorder %v362, 8.507059e+37
    %v364 = vand.u32 %v352, 2147483648
    %v365 = vor.u32 1.1754944e-38, %v364
    %v366 = vsel %vm363, %v365, %v361
    %v367 = vmul.f32 %v342, %v366
    %v368 = vmin.f32 %v367, 1.0
    %v369 = vmax.f32 %v368, -1.0
    %v370 = vadd.f32 %v329, 1.0
    %v371 = vadd.f32 %v369, 1.0
    %v372 = vmul.f32 %v286, %v370
    %v373 = vmul.f32 %v287, %v371
    %374 = vadd.xlane.f32.xlu0 %v372
    %v375 = vpop.xlane.xlu0 %374
    %376 = vadd.xlane.f32.xlu0 %v373
    %v377 = vpop.xlane.xlu0 %376
    %v378 = vmul.f32 %v375, 0.015625
    %v379 = vmul.f32 %v377, 0.015625
    %v380 = vsub.f32 %v372, %v378
    %v381 = vsub.f32 %v373, %v379
    %v382 = vmul.f32 %v380, %v380
    %v383 = vmul.f32 %v381, %v381
    %384 = vadd.xlane.f32.xlu0 %v382
    %v385 = vpop.xlane.xlu0 %384
    %386 = vadd.xlane.f32.xlu0 %v383
    %v387 = vpop.xlane.xlu0 %386
    %v388 = vmul.f32 %v378, %v378
    %v389 = vmul.f32 %v379, %v379
    %v390 = vmul.f32 %v388, 64.0
    %v391 = vmul.f32 %v389, 64.0
    %v392 = vsub.f32 %v385, %v390
    %v393 = vsub.f32 %v387, %v391
    %v394 = vmul.f32 %v392, 0.015625
    %v395 = vmul.f32 %v393, 0.015625
    %v396 = vadd.f32 %v394, 1e-12
    %v397 = vadd.f32 %v395, 1e-12
    %v398 = vrsqrt.pop %v396
    %v399 = vmul.f32 %v398, %v396
    %v400 = vmul.f32 %v399, %v398
    %v401 = vmul.f32 0.5, %v400
    %v402 = vsub.f32 1.5, %v401
    %v403 = vmul.f32 %v398, %v402
    %vm404 = vweird.f32 %v396
    %vm405 = vweird.f32 %v398
    %vm406 = vmor %vm404, %vm405
    %v407 = vsel %vm406, %v398, %v403
    %v408 = vrsqrt.pop %v397
    %v409 = vmul.f32 %v408, %v397
    %v410 = vmul.f32 %v409, %v408
    %v411 = vmul.f32 0.5, %v410
    %v412 = vsub.f32 1.5, %v411
    %v413 = vmul.f32 %v408, %v412
    %vm414 = vweird.f32 %v397
    %vm415 = vweird.f32 %v408
    %vm416 = vmor %vm414, %vm415
    %v417 = vsel %vm416, %v408, %v413
    %v418 = vmul.f32 %v380, %v407
    %v419 = vmul.f32 %v381, %v417
    %v420 = vld [vmem:[%s3] sm:$0x1]
    %v422 = vperm.slane %v420, 0
    %v424 = vmul.f32 %v418, %v422
    %v425 = vmul.f32 %v419, %v422
    %v426 = vld [vmem:[%s4] sm:$0x1]
    %v428 = vperm.slane %v426, 0
    %v430 = vadd.f32 %v424, %v428
    %v431 = vadd.f32 %v425, %v428
    %432 = vst [vmem:[#allocation7] sm:$0xff] %v430
    %433 = vst [vmem:[#allocation7 + $0x8] sm:$0xff] %v431
    // Predicated region
    $region30: #{tpu_custom_call.1} parent=1 // pred_check
      _
    $region31: #{tpu_custom_call.1} parent=1 // pred_check_branch
      %435 = sbr.rel (0) target = $region33
    $region32: #{tpu_custom_call.1} parent=1 // pred_region
      %437 = vsyncadd [#allocation4], 0
      %s438 = sshll.u32 [#allocation7], 4
      %s439 = int_to_ptr.vmem [resolvable:$true] %s438
      %s440 = sshll.u32 %s5, 4
      %s441 = int_to_ptr.hbm [resolvable:$true] %s440
      %446 = dma.vmem_to_hbm [thread:$0]  %s439, 256, %s441, [#allocation4], 128, 128, 8
    $region33: #{tpu_custom_call.1} parent=1 // pred_fallthru
      _
    // Predicated region
    $region34: #{tpu_custom_call.1} parent=1 // pred_check
      _
    $region35: #{tpu_custom_call.1} parent=1 // pred_check_branch
      %448 = sbr.rel (0) target = $region37
    $region36: #{tpu_custom_call.1} parent=1 // pred_region
      %450 = dma.done [#allocation4], 256
    $region37: #{tpu_custom_call.1} parent=1 // pred_fallthru
      _
    %451 = vsyncpa [#allocation3], 1
    %452 = vsyncpa [#allocation6], 1
    %453 = vsyncpa [#allocation4], 1

// kernel: tpu_custom_call.1
$region0: #{tpu_custom_call.1}
  #allocation0 [shape = 'u32[]', space=smem, size = 0x4, offset = 0x4, fixed_abs, tag = 'smem constant byte address 0x4 - core index']
  #allocation1 [shape = 'u32[72,128]{1,0:T(1,128)}', space=vmem, size = 0x9000, scoped, tag = 'internal scratch']
  %s0 = inlined_call_operand.hbm [shape: f32[16,32], index: 0, kind: input, shape index: {}]
  %s1 = inlined_call_operand.hbm [shape: f32[32,128], index: 1, kind: input, shape index: {}]
  %s2 = inlined_call_operand.vmem [shape: f32[1,128], index: 2, kind: input, shape index: {}]
  %s3 = inlined_call_operand.vmem [shape: f32[1,128], index: 3, kind: input, shape index: {}]
  %s4 = inlined_call_operand.vmem [shape: f32[1,128], index: 4, kind: input, shape index: {}]
  %s5 = inlined_call_operand.hbm [shape: f32[16,128], index: 5, kind: output, shape index: {}]
  %s6 = sld [smem:[#allocation0]]
  $region38: #{tpu_custom_call.1} parent=0
    _
  %s8 = ssub.s32 1, %s6
  %s9 = scalar_select 0, %s8, %s6
  $region1: #{tpu_custom_call.1} parent=0
    #allocation2 [shape = 'u8[8192]{0}', space=vmem, size = 0x2000, scoped, tag = 'input window, operand 0, single buffered']
    #allocation3 [shape = 's32[1]{0}', space=sflag, size = 0x4, scoped, tag = 'scoped memory for tpu_custom_call.1']
    #allocation4 [shape = 's32[1]{0}', space=sflag, size = 0x4, scoped, tag = 'scoped memory for tpu_custom_call.1']
    #allocation5 [shape = 'u8[16384]{0}', space=vmem, size = 0x4000, scoped, tag = 'input window, operand 1, single buffered']
    #allocation6 [shape = 's32[1]{0}', space=sflag, size = 0x4, scoped, tag = 'scoped memory for tpu_custom_call.1']
    #allocation7 [shape = 'u8[8192]{0}', space=vmem, size = 0x2000, scoped, tag = 'output window, operand 0, single buffered']
    %10 = vsyncpa [#allocation3], 0
    %11 = vsyncpa [#allocation6], 0
    %12 = vsyncpa [#allocation4], 0
    // Predicated region
    $region2: #{tpu_custom_call.1} parent=1 // pred_check
      _
    $region3: #{tpu_custom_call.1} parent=1 // pred_check_branch
      %14 = sbr.rel (0) target = $region5
    $region4: #{tpu_custom_call.1} parent=1 // pred_region
      %16 = vsyncadd [#allocation3], 0
      %s17 = sshll.u32 %s0, 4
      %s18 = int_to_ptr.hbm [resolvable:$true] %s17
      %s19 = sshll.u32 [#allocation2], 4
      %s20 = int_to_ptr.vmem [resolvable:$true] %s19
      %25 = dma.hbm_to_vmem [thread:$0]  %s18, 256, %s20, [#allocation3], 128, 128, 8
    $region5: #{tpu_custom_call.1} parent=1 // pred_fallthru
      _
    // Predicated region
    $region6: #{tpu_custom_call.1} parent=1 // pred_check
      _
    $region7: #{tpu_custom_call.1} parent=1 // pred_check_branch
      %27 = sbr.rel (0) target = $region9
    $region8: #{tpu_custom_call.1} parent=1 // pred_region
      %29 = vsyncadd [#allocation6], 0
      %s30 = sshll.u32 %s1, 4
      %s31 = int_to_ptr.hbm [resolvable:$true] %s30
      %s32 = sshll.u32 [#allocation5], 4
      %s33 = int_to_ptr.vmem [resolvable:$true] %s32
      %38 = dma.hbm_to_vmem [thread:$0]  %s31, 512, %s33, [#allocation6], 128, 128, 8
    $region9: #{tpu_custom_call.1} parent=1 // pred_fallthru
      _
    // Predicated region
    $region10: #{tpu_custom_call.1} parent=1 // pred_check
      _
    $region11: #{tpu_custom_call.1} parent=1 // pred_check_branch
      %40 = sbr.rel (0) target = $region13
    $region12: #{tpu_custom_call.1} parent=1 // pred_region
      _
    $region13: #{tpu_custom_call.1} parent=1 // pred_fallthru
      _
    // Predicated region
    $region14: #{tpu_custom_call.1} parent=1 // pred_check
      _
    $region15: #{tpu_custom_call.1} parent=1 // pred_check_branch
      %42 = sbr.rel (0) target = $region17
    $region16: #{tpu_custom_call.1} parent=1 // pred_region
      _
    $region17: #{tpu_custom_call.1} parent=1 // pred_fallthru
      _
    // Predicated region
    $region18: #{tpu_custom_call.1} parent=1 // pred_check
      _
    $region19: #{tpu_custom_call.1} parent=1 // pred_check_branch
      %44 = sbr.rel (0) target = $region21
    $region20: #{tpu_custom_call.1} parent=1 // pred_region
      _
    $region21: #{tpu_custom_call.1} parent=1 // pred_fallthru
      _
    // Predicated region
    $region22: #{tpu_custom_call.1} parent=1 // pred_check
      _
    $region23: #{tpu_custom_call.1} parent=1 // pred_check_branch
      %46 = sbr.rel (0) target = $region25
    $region24: #{tpu_custom_call.1} parent=1 // pred_region
      %48 = dma.done [#allocation3], 256
    $region25: #{tpu_custom_call.1} parent=1 // pred_fallthru
      _
    // Predicated region
    $region26: #{tpu_custom_call.1} parent=1 // pred_check
      _
    $region27: #{tpu_custom_call.1} parent=1 // pred_check_branch
      %50 = sbr.rel (0) target = $region29
    $region28: #{tpu_custom_call.1} parent=1 // pred_region
      %52 = dma.done [#allocation6], 512
    $region29: #{tpu_custom_call.1} parent=1 // pred_fallthru
      _
    %v53 = vld [vmem:[#allocation2] sm:$0xff]
    %v54 = vld [vmem:[#allocation2 + $0x8] sm:$0xff]
    %v55 = vld [vmem:[#allocation5] sm:$0xff]
    %v56 = vld [vmem:[#allocation5 + $0x8] sm:$0xff]
    %v57 = vld [vmem:[#allocation5 + $0x10] sm:$0xff]
    %v58 = vld [vmem:[#allocation5 + $0x18] sm:$0xff]
    %v59 = vld [vmem:[%s2] sm:$0x1]
    %v61 = vperm.slane %v59, 0
    %vm63 = vcmask 261120
    %v65 = vsel %vm63, %v53, 0
    %v68 = vsel %vm63, %v54, 0
    %70 = vmatpush.msra.mxu0 0.0
    %71 = vmatpush.msra.mxu0 0.0
    %72 = vmatpush.msra.mxu0 0.0
    %73 = vmatpush.msra.mxu0 0.0
    %74 = vmatpush.msra.mxu0 0.0
    %75 = vmatpush.msra.mxu0 0.0
    %76 = vmatpush.msra.mxu0 0.0
    %77 = vmatpush.msra.mxu0 0.0
    %78 = vmatpush.msra.mxu0 0.0
    %79 = vmatpush.msra.mxu0 0.0
    %80 = vmatpush.msra.mxu0 0.0
    %81 = vmatpush.msra.mxu0 0.0
    %v82 = vand.u32 %v58, 4294901760
    %83 = vmatpush.msra.mxu0 %v82
    %v84 = vand.u32 %v57, 4294901760
    %85 = vmatpush.msra.mxu0 %v84
    %v86 = vand.u32 %v56, 4294901760
    %87 = vmatpush.msra.mxu0 %v86
    %v88 = vand.u32 %v55, 4294901760
    %89 = vmatpush.msra.mxu0 %v88
    %v90 = vand.u32 %v65, 4294901760
    %v91 = vsub.f32 %v65, %v90
    %v92 = vand.u32 %v91, 4294901760
    %v93 = vsub.f32 %v91, %v92
    %v94 = vand.u32 %v93, 4294901760
    %95 = vmatmul.f32.gmra.mxu0 %v94
    %v96 = vpop.f32.mrf.mxu0
    %v97 = vadd.f32 %v61, %v96
    %v98 = vand.u32 %v68, 4294901760
    %v99 = vsub.f32 %v68, %v98
    %v100 = vand.u32 %v99, 4294901760
    %v101 = vsub.f32 %v99, %v100
    %v102 = vand.u32 %v101, 4294901760
    %103 = vmatmul.f32.gmra.mxu0 %v102
    %v104 = vpop.f32.mrf.mxu0
    %v105 = vadd.f32 %v61, %v104
    %106 = vdwg.mxu0
    %107 = vmatpush.msra.mxu0 0.0
    %108 = vmatpush.msra.mxu0 0.0
    %109 = vmatpush.msra.mxu0 0.0
    %110 = vmatpush.msra.mxu0 0.0
    %111 = vmatpush.msra.mxu0 0.0
    %112 = vmatpush.msra.mxu0 0.0
    %113 = vmatpush.msra.mxu0 0.0
    %114 = vmatpush.msra.mxu0 0.0
    %115 = vmatpush.msra.mxu0 0.0
    %116 = vmatpush.msra.mxu0 0.0
    %117 = vmatpush.msra.mxu0 0.0
    %118 = vmatpush.msra.mxu0 0.0
    %v119 = vand.u32 %v58, 4294901760
    %v120 = vsub.f32 %v58, %v119
    %v121 = vand.u32 %v120, 4294901760
    %v122 = vsub.f32 %v120, %v121
    %v123 = vand.u32 %v122, 4294901760
    %124 = vmatpush.msra.mxu0 %v123
    %v125 = vand.u32 %v57, 4294901760
    %v126 = vsub.f32 %v57, %v125
    %v127 = vand.u32 %v126, 4294901760
    %v128 = vsub.f32 %v126, %v127
    %v129 = vand.u32 %v128, 4294901760
    %130 = vmatpush.msra.mxu0 %v129
    %v131 = vand.u32 %v56, 4294901760
    %v132 = vsub.f32 %v56, %v131
    %v133 = vand.u32 %v132, 4294901760
    %v134 = vsub.f32 %v132, %v133
    %v135 = vand.u32 %v134, 4294901760
    %136 = vmatpush.msra.mxu0 %v135
    %v137 = vand.u32 %v55, 4294901760
    %v138 = vsub.f32 %v55, %v137
    %v139 = vand.u32 %v138, 4294901760
    %v140 = vsub.f32 %v138, %v139
    %v141 = vand.u32 %v140, 4294901760
    %142 = vmatpush.msra.mxu0 %v141
    %v143 = vand.u32 %v65, 4294901760
    %144 = vmatmul.f32.gmra.mxu0 %v143
    %v145 = vpop.f32.mrf.mxu0
    %v146 = vadd.f32 %v97, %v145
    %v147 = vand.u32 %v68, 4294901760
    %148 = vmatmul.f32.gmra.mxu0 %v147
    %v149 = vpop.f32.mrf.mxu0
    %v150 = vadd.f32 %v105, %v149
    %151 = vdwg.mxu0
    %152 = vmatpush.msra.mxu0 0.0
    %153 = vmatpush.msra.mxu0 0.0
    %154 = vmatpush.msra.mxu0 0.0
    %155 = vmatpush.msra.mxu0 0.0
    %156 = vmatpush.msra.mxu0 0.0
    %157 = vmatpush.msra.mxu0 0.0
    %158 = vmatpush.msra.mxu0 0.0
    %159 = vmatpush.msra.mxu0 0.0
    %160 = vmatpush.msra.mxu0 0.0
    %161 = vmatpush.msra.mxu0 0.0
    %162 = vmatpush.msra.mxu0 0.0
    %163 = vmatpush.msra.mxu0 0.0
    %v164 = vand.u32 %v58, 4294901760
    %v165 = vsub.f32 %v58, %v164
    %166 = vmatpush.msra.mxu0 %v165
    %v167 = vand.u32 %v57, 4294901760
    %v168 = vsub.f32 %v57, %v167
    %169 = vmatpush.msra.mxu0 %v168
    %v170 = vand.u32 %v56, 4294901760
    %v171 = vsub.f32 %v56, %v170
    %172 = vmatpush.msra.mxu0 %v171
    %v173 = vand.u32 %v55, 4294901760
    %v174 = vsub.f32 %v55, %v173
    %175 = vmatpush.msra.mxu0 %v174
    %v176 = vand.u32 %v65, 4294901760
    %v177 = vsub.f32 %v65, %v176
    %178 = vmatmul.f32.gmra.mxu0 %v177
    %v179 = vpop.f32.mrf.mxu0
    %v180 = vadd.f32 %v146, %v179
    %v181 = vand.u32 %v68, 4294901760
    %v182 = vsub.f32 %v68, %v181
    %183 = vmatmul.f32.gmra.mxu0 %v182
    %v184 = vpop.f32.mrf.mxu0
    %v185 = vadd.f32 %v150, %v184
    %186 = vdwg.mxu0
    %187 = vmatpush.msra.mxu0 0.0
    %188 = vmatpush.msra.mxu0 0.0
    %189 = vmatpush.msra.mxu0 0.0
    %190 = vmatpush.msra.mxu0 0.0
    %191 = vmatpush.msra.mxu0 0.0
    %192 = vmatpush.msra.mxu0 0.0
    %193 = vmatpush.msra.mxu0 0.0
    %194 = vmatpush.msra.mxu0 0.0
    %195 = vmatpush.msra.mxu0 0.0
    %196 = vmatpush.msra.mxu0 0.0
    %197 = vmatpush.msra.mxu0 0.0
    %198 = vmatpush.msra.mxu0 0.0
    %v199 = vand.u32 %v58, 4294901760
    %200 = vmatpush.msra.mxu0 %v199
    %v201 = vand.u32 %v57, 4294901760
    %202 = vmatpush.msra.mxu0 %v201
    %v203 = vand.u32 %v56, 4294901760
    %204 = vmatpush.msra.mxu0 %v203
    %v205 = vand.u32 %v55, 4294901760
    %206 = vmatpush.msra.mxu0 %v205
    %v207 = vand.u32 %v65, 4294901760
    %v208 = vsub.f32 %v65, %v207
    %v209 = vand.u32 %v208, 4294901760
    %210 = vmatmul.f32.gmra.mxu0 %v209
    %v211 = vpop.f32.mrf.mxu0
    %v212 = vadd.f32 %v180, %v211
    %v213 = vand.u32 %v68, 4294901760
    %v214 = vsub.f32 %v68, %v213
    %v215 = vand.u32 %v214, 4294901760
    %216 = vmatmul.f32.gmra.mxu0 %v215
    %v217 = vpop.f32.mrf.mxu0
    %v218 = vadd.f32 %v185, %v217
    %219 = vdwg.mxu0
    %220 = vmatpush.msra.mxu0 0.0
    %221 = vmatpush.msra.mxu0 0.0
    %222 = vmatpush.msra.mxu0 0.0
    %223 = vmatpush.msra.mxu0 0.0
    %224 = vmatpush.msra.mxu0 0.0
    %225 = vmatpush.msra.mxu0 0.0
    %226 = vmatpush.msra.mxu0 0.0
    %227 = vmatpush.msra.mxu0 0.0
    %228 = vmatpush.msra.mxu0 0.0
    %229 = vmatpush.msra.mxu0 0.0
    %230 = vmatpush.msra.mxu0 0.0
    %231 = vmatpush.msra.mxu0 0.0
    %v232 = vand.u32 %v58, 4294901760
    %v233 = vsub.f32 %v58, %v232
    %v234 = vand.u32 %v233, 4294901760
    %235 = vmatpush.msra.mxu0 %v234
    %v236 = vand.u32 %v57, 4294901760
    %v237 = vsub.f32 %v57, %v236
    %v238 = vand.u32 %v237, 4294901760
    %239 = vmatpush.msra.mxu0 %v238
    %v240 = vand.u32 %v56, 4294901760
    %v241 = vsub.f32 %v56, %v240
    %v242 = vand.u32 %v241, 4294901760
    %243 = vmatpush.msra.mxu0 %v242
    %v244 = vand.u32 %v55, 4294901760
    %v245 = vsub.f32 %v55, %v244
    %v246 = vand.u32 %v245, 4294901760
    %247 = vmatpush.msra.mxu0 %v246
    %v248 = vand.u32 %v65, 4294901760
    %249 = vmatmul.f32.gmra.mxu0 %v248
    %v250 = vpop.f32.mrf.mxu0
    %v251 = vadd.f32 %v212, %v250
    %v252 = vand.u32 %v68, 4294901760
    %253 = vmatmul.f32.gmra.mxu0 %v252
    %v254 = vpop.f32.mrf.mxu0
    %v255 = vadd.f32 %v218, %v254
    %256 = vdwg.mxu0
    %257 = vmatpush.msra.mxu0 0.0
    %258 = vmatpush.msra.mxu0 0.0
    %259 = vmatpush.msra.mxu0 0.0
    %260 = vmatpush.msra.mxu0 0.0
    %261 = vmatpush.msra.mxu0 0.0
    %262 = vmatpush.msra.mxu0 0.0
    %263 = vmatpush.msra.mxu0 0.0
    %264 = vmatpush.msra.mxu0 0.0
    %265 = vmatpush.msra.mxu0 0.0
    %266 = vmatpush.msra.mxu0 0.0
    %267 = vmatpush.msra.mxu0 0.0
    %268 = vmatpush.msra.mxu0 0.0
    %v269 = vand.u32 %v58, 4294901760
    %270 = vmatpush.msra.mxu0 %v269
    %v271 = vand.u32 %v57, 4294901760
    %272 = vmatpush.msra.mxu0 %v271
    %v273 = vand.u32 %v56, 4294901760
    %274 = vmatpush.msra.mxu0 %v273
    %v275 = vand.u32 %v55, 4294901760
    %276 = vmatpush.msra.mxu0 %v275
    %v277 = vand.u32 %v65, 4294901760
    %278 = vmatmul.f32.gmra.mxu0 %v277
    %v279 = vpop.f32.mrf.mxu0
    %v280 = vadd.f32 %v251, %v279
    %v281 = vand.u32 %v68, 4294901760
    %282 = vmatmul.f32.gmra.mxu0 %v281
    %v283 = vpop.f32.mrf.mxu0
    %v284 = vadd.f32 %v255, %v283
    %285 = vdwg.mxu0
    %v286 = vmul.f32 %v280, 0.5
    %v287 = vmul.f32 %v284, 0.5
    %v288 = vmul.f32 %v280, 0.70710677
    %v289 = vmul.f32 %v284, 0.70710677
    %v290 = vmul.f32 %v288, %v288
    %v291 = vmin.f32 16.0, %v290
    %v292 = vmul.f32 %v291, 2.1237322e-06
    %v293 = vadd.f32 %v292, 0.00028619796
    %v294 = vmul.f32 %v291, %v293
    %v295 = vadd.f32 %v294, 0.0036580483
    %v296 = vmul.f32 %v291, %v295
    %v297 = vadd.f32 %v296, 0.05243302
    %v298 = vmul.f32 %v291, %v297
    %v299 = vadd.f32 %v298, 0.18741608
    %v300 = vmul.f32 %v291, %v299
    %v301 = vadd.f32 %v300, 1.1283791
    %v302 = vmul.f32 %v288, %v301
    %v303 = vmul.f32 %v291, 3.8918573e-05
    %v304 = vadd.f32 %v303, 0.001143296
    %v305 = vmul.f32 %v291, %v304
    %v306 = vadd.f32 %v305, 0.014752088
    %v307 = vmul.f32 %v291, %v306
    %v308 = vadd.f32 %v307, 0.112945676
    %v309 = vmul.f32 %v291, %v308
    %v310 = vadd.f32 %v309, 0.4994258
    %v311 = vmul.f32 %v291, %v310
    %v312 = vadd.f32 %v311, 1.0
    %v313 = vrcp.pop %v312
    %v314 = vmul.f32 %v312, %v313
    %v315 = vsub.f32 1.0, %v314
    %v316 = vmul.f32 %v313, %v315
    %v317 = vadd.f32 %v313, %v316
    %vm318 = vweird.f32 %v312
    %vm319 = vweird.f32 %v313
    %vm320 = vmor %vm318, %vm319
    %v321 = vsel %vm320, %v313, %v317
    %v322 = vand.u32 2147483647, %v312
    %vm323 = vcmp.eq.f32.partialorder %v322, 8.507059e+37
    %v324 = vand.u32 %v312, 2147483648
    %v325 = vor.u32 1.1754944e-38, %v324
    %v326 = vsel %vm323, %v325, %v321
    %v327 = vmul.f32 %v302, %v326
    %v328 = vmin.f32 %v327, 1.0
    %v329 = vmax.f32 %v328, -1.0
    %v330 = vmul.f32 %v289, %v289
    %v331 = vmin.f32 16.0, %v330
    %v332 = vmul.f32 %v331, 2.1237322e-06
    %v333 = vadd.f32 %v332, 0.00028619796
    %v334 = vmul.f32 %v331, %v333
    %v335 = vadd.f32 %v334, 0.0036580483
    %v336 = vmul.f32 %v331, %v335
    %v337 = vadd.f32 %v336, 0.05243302
    %v338 = vmul.f32 %v331, %v337
    %v339 = vadd.f32 %v338, 0.18741608
    %v340 = vmul.f32 %v331, %v339
    %v341 = vadd.f32 %v340, 1.1283791
    %v342 = vmul.f32 %v289, %v341
    %v343 = vmul.f32 %v331, 3.8918573e-05
    %v344 = vadd.f32 %v343, 0.001143296
    %v345 = vmul.f32 %v331, %v344
    %v346 = vadd.f32 %v345, 0.014752088
    %v347 = vmul.f32 %v331, %v346
    %v348 = vadd.f32 %v347, 0.112945676
    %v349 = vmul.f32 %v331, %v348
    %v350 = vadd.f32 %v349, 0.4994258
    %v351 = vmul.f32 %v331, %v350
    %v352 = vadd.f32 %v351, 1.0
    %v353 = vrcp.pop %v352
    %v354 = vmul.f32 %v352, %v353
    %v355 = vsub.f32 1.0, %v354
    %v356 = vmul.f32 %v353, %v355
    %v357 = vadd.f32 %v353, %v356
    %vm358 = vweird.f32 %v352
    %vm359 = vweird.f32 %v353
    %vm360 = vmor %vm358, %vm359
    %v361 = vsel %vm360, %v353, %v357
    %v362 = vand.u32 2147483647, %v352
    %vm363 = vcmp.eq.f32.partialorder %v362, 8.507059e+37
    %v364 = vand.u32 %v352, 2147483648
    %v365 = vor.u32 1.1754944e-38, %v364
    %v366 = vsel %vm363, %v365, %v361
    %v367 = vmul.f32 %v342, %v366
    %v368 = vmin.f32 %v367, 1.0
    %v369 = vmax.f32 %v368, -1.0
    %v370 = vadd.f32 %v329, 1.0
    %v371 = vadd.f32 %v369, 1.0
    %v372 = vmul.f32 %v286, %v370
    %v373 = vmul.f32 %v287, %v371
    %374 = vadd.xlane.f32.xlu0 %v372
    %v375 = vpop.xlane.xlu0 %374
    %376 = vadd.xlane.f32.xlu0 %v373
    %v377 = vpop.xlane.xlu0 %376
    %v378 = vmul.f32 %v375, 0.015625
    %v379 = vmul.f32 %v377, 0.015625
    %v380 = vsub.f32 %v372, %v378
    %v381 = vsub.f32 %v373, %v379
    %v382 = vmul.f32 %v380, %v380
    %v383 = vmul.f32 %v381, %v381
    %384 = vadd.xlane.f32.xlu0 %v382
    %v385 = vpop.xlane.xlu0 %384
    %386 = vadd.xlane.f32.xlu0 %v383
    %v387 = vpop.xlane.xlu0 %386
    %v388 = vmul.f32 %v378, %v378
    %v389 = vmul.f32 %v379, %v379
    %v390 = vmul.f32 %v388, 64.0
    %v391 = vmul.f32 %v389, 64.0
    %v392 = vsub.f32 %v385, %v390
    %v393 = vsub.f32 %v387, %v391
    %v394 = vmul.f32 %v392, 0.015625
    %v395 = vmul.f32 %v393, 0.015625
    %v396 = vadd.f32 %v394, 1e-12
    %v397 = vadd.f32 %v395, 1e-12
    %v398 = vrsqrt.pop %v396
    %v399 = vmul.f32 %v398, %v396
    %v400 = vmul.f32 %v399, %v398
    %v401 = vmul.f32 0.5, %v400
    %v402 = vsub.f32 1.5, %v401
    %v403 = vmul.f32 %v398, %v402
    %vm404 = vweird.f32 %v396
    %vm405 = vweird.f32 %v398
    %vm406 = vmor %vm404, %vm405
    %v407 = vsel %vm406, %v398, %v403
    %v408 = vrsqrt.pop %v397
    %v409 = vmul.f32 %v408, %v397
    %v410 = vmul.f32 %v409, %v408
    %v411 = vmul.f32 0.5, %v410
    %v412 = vsub.f32 1.5, %v411
    %v413 = vmul.f32 %v408, %v412
    %vm414 = vweird.f32 %v397
    %vm415 = vweird.f32 %v408
    %vm416 = vmor %vm414, %vm415
    %v417 = vsel %vm416, %v408, %v413
    %v418 = vmul.f32 %v380, %v407
    %v419 = vmul.f32 %v381, %v417
    %v420 = vld [vmem:[%s3] sm:$0x1]
    %v422 = vperm.slane %v420, 0
    %v424 = vmul.f32 %v418, %v422
    %v425 = vmul.f32 %v419, %v422
    %v426 = vld [vmem:[%s4] sm:$0x1]
    %v428 = vperm.slane %v426, 0
    %v430 = vadd.f32 %v424, %v428
    %v431 = vadd.f32 %v425, %v428
    %432 = vst [vmem:[#allocation7] sm:$0xff] %v430
    %433 = vst [vmem:[#allocation7 + $0x8] sm:$0xff] %v431
    // Predicated region
    $region30: #{tpu_custom_call.1} parent=1 // pred_check
      _
    $region31: #{tpu_custom_call.1} parent=1 // pred_check_branch
      %435 = sbr.rel (0) target = $region33
    $region32: #{tpu_custom_call.1} parent=1 // pred_region
      %437 = vsyncadd [#allocation4], 0
      %s438 = sshll.u32 [#allocation7], 4
      %s439 = int_to_ptr.vmem [resolvable:$true] %s438
      %s440 = sshll.u32 %s5, 4
      %s441 = int_to_ptr.hbm [resolvable:$true] %s440
      %446 = dma.vmem_to_hbm [thread:$0]  %s439, 256, %s441, [#allocation4], 128, 128, 8
    $region33: #{tpu_custom_call.1} parent=1 // pred_fallthru
      _
    // Predicated region
    $region34: #{tpu_custom_call.1} parent=1 // pred_check
      _
    $region35: #{tpu_custom_call.1} parent=1 // pred_check_branch
      %448 = sbr.rel (0) target = $region37
    $region36: #{tpu_custom_call.1} parent=1 // pred_region
      %450 = dma.done [#allocation4], 256
    $region37: #{tpu_custom_call.1} parent=1 // pred_fallthru
      _
    %451 = vsyncpa [#allocation3], 1
    %452 = vsyncpa [#allocation6], 1
    %453 = vsyncpa [#allocation4], 1

</llo_original>
